<compile_context>
chip_gen: v7x
topology: tpu7x:2x2x1
jax: 0.10.0
libtpu: 0.0.40
codegen_flags: <defaults>
</compile_context>

<pallas_src>
import functools

import jax
import jax.numpy as jnp
from jax.experimental import pallas as pl
from jax.experimental.pallas import tpu as pltpu


def _round_up(x: int, m: int) -> int:
    return ((x + m - 1) // m) * m


def _vmem_capacity_bytes() -> int:
    """Per-core VMEM capacity; falls back to the v7x floor (64 MiB)."""
    try:
        cap = int(pltpu.get_tpu_info().vmem_capacity_bytes)
        if cap > 0:
            return cap
    except Exception:
        pass
    return 64 * 1024 * 1024


# ---------------------------------------------------------------------------
# Fused path: whole weights resident in VMEM, grid over batch tiles only.
# ---------------------------------------------------------------------------
def _adjust_dim_fused_kernel(x_ref, w1_ref, b1_ref, w2_ref, b2_ref, o_ref):
    # h = tanh(x @ W1 + b1): MXU matmul, f32 accumulation, f32 bias + tanh.
    # h stays in vregs (no VMEM round-trip) and feeds the second matmul.
    h = jnp.tanh(
        jnp.dot(x_ref[...], w1_ref[...], preferred_element_type=jnp.float32)
        + b1_ref[...]
    )
    # out = tanh(h @ W2 + b2)
    o = jnp.tanh(
        jnp.dot(h.astype(w2_ref.dtype), w2_ref[...],
                preferred_element_type=jnp.float32)
        + b2_ref[...]
    )
    o_ref[...] = o.astype(o_ref.dtype)


# ---------------------------------------------------------------------------
# Fallback path: weights too big for VMEM -> stream weight tiles over an
# M/N/K grid with a pl.when-initialized f32 accumulator (standard pattern).
# ---------------------------------------------------------------------------
def _linear_tanh_kernel(x_ref, w_ref, b_ref, o_ref, acc_ref):
    k = pl.program_id(2)

    @pl.when(k == 0)
    def _():
        acc_ref[...] = jnp.zeros_like(acc_ref)

    acc_ref[...] += jnp.dot(x_ref[...], w_ref[...],
                            preferred_element_type=jnp.float32)

    @pl.when(k == pl.num_programs(2) - 1)
    def _():
        o_ref[...] = jnp.tanh(acc_ref[...] + b_ref[...]).astype(o_ref.dtype)


def _pick_tile(dim: int, candidates=(512, 256, 128)) -> int:
    for c in candidates:
        if dim % c == 0:
            return c
    return 128  # callers pad dim to a multiple of 128 first


def _tiled_linear_tanh(x, w, b, out_dtype, *, tm, vmem_limit):
    """out = tanh(x @ w + b) with N/K tiled weights. K and N must be padded
    (with zeros) to multiples of 128 by the caller; M may be ragged."""
    M, K = x.shape
    _, N = w.shape
    tn = _pick_tile(N)
    tk = _pick_tile(K)
    grid = (pl.cdiv(M, tm), N // tn, K // tk)
    return pl.pallas_call(
        _linear_tanh_kernel,
        out_shape=jax.ShapeDtypeStruct((M, N), out_dtype),
        grid_spec=pltpu.PrefetchScalarGridSpec(
            num_scalar_prefetch=0,
            grid=grid,
            in_specs=[
                pl.BlockSpec((tm, tk), lambda i, j, k: (i, k)),
                pl.BlockSpec((tk, tn), lambda i, j, k: (k, j)),
                pl.BlockSpec((1, tn), lambda i, j, k: (0, j)),
            ],
            out_specs=pl.BlockSpec((tm, tn), lambda i, j, k: (i, j)),
            scratch_shapes=[pltpu.VMEM((tm, tn), jnp.float32)],
        ),
        compiler_params=pltpu.CompilerParams(
            dimension_semantics=("parallel", "parallel", "arbitrary"),
            vmem_limit_bytes=vmem_limit,
        ),
    )(x, w, b)


# ---------------------------------------------------------------------------
# Public forward
# ---------------------------------------------------------------------------
@functools.partial(jax.jit, static_argnames=("block_b", "compute_dtype"))
def adjust_dim_forward(x, w1, b1, w2, b2, *, block_b=None, compute_dtype=None):
    """Fused forward: tanh(tanh(x @ W1 + b1) @ W2 + b2).

    x : (B, in_dim)
    w1: (in_dim, hid)   b1: (1, hid) or (hid,)
    w2: (hid, out_dim)  b2: (1, out_dim) or (out_dim,)

    compute_dtype: e.g. jnp.bfloat16 to feed the MXU bf16 on v5e/v6e/v7x
        (accumulation, bias add and tanh stay f32). Default None -> x.dtype;
        for production inference on v6e/v7x pass bf16 (and pre-cast weights).
    """
    B, in_dim = x.shape
    hid = w1.shape[1]
    out_dim = w2.shape[1]
    out_dtype = x.dtype
    cdt = jnp.dtype(compute_dtype) if compute_dtype is not None else jnp.dtype(x.dtype)

    # --- generation-aware VMEM budget -------------------------------------
    vmem_cap = _vmem_capacity_bytes()
    vmem_limit = min(vmem_cap * 3 // 4, 100 * 1024 * 1024)   # 48 MiB v7x, 96 MiB v5e/v6e
    vmem_budget = vmem_limit * 3 // 4

    isz = jnp.dtype(cdt).itemsize
    osz = jnp.dtype(out_dtype).itemsize
    weight_bytes = (in_dim * hid + hid * out_dim) * isz + (hid + out_dim) * 4

    # Casts are identity (elided) for the default f32 path; for bf16 they are
    # ideally hoisted by pre-casting the params once outside this function.
    xc = x.astype(cdt)
    w1c = w1.astype(cdt)
    w2c = w2.astype(cdt)
    b1f = b1.reshape(1, -1).astype(jnp.float32)
    b2f = b2.reshape(1, -1).astype(jnp.float32)

    if weight_bytes <= vmem_budget // 2:
        # ----- fused path: weights single-buffered & fully resident -------
        # Per batch row: x tile (double-buffered) + out tile (double-buffered)
        # + headroom for the in-vreg/spilled h.
        per_row = 2 * in_dim * isz + 2 * out_dim * osz + hid * 4
        bb = max(8, ((vmem_budget - weight_bytes) // per_row // 8) * 8)
        bb = min(bb, 1024)
        if block_b is not None:
            bb = min(bb, max(8, _round_up(block_b, 8)))
        # Megacore / pipelining: aim for >= 4 grid steps when the batch allows
        # (>= 2 steps per v7x TensorCore so the next x DMA hides under compute).
        if B >= 32:
            bb = min(bb, max(8, _round_up(pl.cdiv(B, 4), 8)))
        bb = min(bb, _round_up(B, 8))
        grid = (pl.cdiv(B, bb),)

        cost = pl.CostEstimate(
            flops=2 * B * (in_dim * hid + hid * out_dim),
            transcendentals=B * (hid + out_dim),
            bytes_accessed=B * in_dim * isz + weight_bytes + B * out_dim * osz,
        )

        return pl.pallas_call(
            _adjust_dim_fused_kernel,
            out_shape=jax.ShapeDtypeStruct((B, out_dim), out_dtype),
            grid_spec=pltpu.PrefetchScalarGridSpec(
                num_scalar_prefetch=0,
                grid=grid,
                in_specs=[
                    # x tile varies with the grid step -> default double buffer.
                    pl.BlockSpec((bb, in_dim), lambda i: (i, 0)),
                    # constant-index operands: single buffer is enough.
                    pl.BlockSpec((in_dim, hid), lambda i: (0, 0),
                                 pipeline_mode=pl.Buffered(1)),
                    pl.BlockSpec((1, hid), lambda i: (0, 0),
                                 pipeline_mode=pl.Buffered(1)),
                    pl.BlockSpec((hid, out_dim), lambda i: (0, 0),
                                 pipeline_mode=pl.Buffered(1)),
                    pl.BlockSpec((1, out_dim), lambda i: (0, 0),
                                 pipeline_mode=pl.Buffered(1)),
                ],
                out_specs=pl.BlockSpec((bb, out_dim), lambda i: (i, 0)),
            ),
            compiler_params=pltpu.CompilerParams(
                dimension_semantics=("parallel",),
                vmem_limit_bytes=vmem_limit,
            ),
            cost_estimate=cost,
        )(xc, w1c, b1f, w2c, b2f)

    # ----- fallback path: weights too big for VMEM -> stream weight tiles ----
    # Zero padding is inert here (tanh(0) = 0 propagates zeros through layer 2).
    in_pad = _round_up(in_dim, 128)
    hid_pad = _round_up(hid, 128)
    out_pad = _round_up(out_dim, 128)
    xp = jnp.zeros((B, in_pad), cdt).at[:, :in_dim].set(xc)
    w1p = jnp.zeros((in_pad, hid_pad), cdt).at[:in_dim, :hid].set(w1c)
    b1p = jnp.zeros((1, hid_pad), jnp.float32).at[:, :hid].set(b1f)
    w2p = jnp.zeros((hid_pad, out_pad), cdt).at[:hid, :out_dim].set(w2c)
    b2p = jnp.zeros((1, out_pad), jnp.float32).at[:, :out_dim].set(b2f)

    tm = min(512, _round_up(B, 8))
    if block_b is not None:
        tm = min(tm, max(8, _round_up(block_b, 8)))
    h = _tiled_linear_tanh(xp, w1p, b1p, cdt, tm=tm, vmem_limit=vmem_limit)
    out = _tiled_linear_tanh(h, w2p, b2p, out_dtype, tm=tm, vmem_limit=vmem_limit)
    return out[:, :out_dim]


def init_adjust_dim_params(key, in_dim, out_dim, dtype=jnp.float32):
    """Deterministic init mimicking nn.Linear: U(-1/sqrt(fan_in), 1/sqrt(fan_in))."""
    k1, k2, k3, k4 = jax.random.split(key, 4)
    lim1 = 1.0 / jnp.sqrt(jnp.array(in_dim, jnp.float32))
    lim2 = 1.0 / jnp.sqrt(jnp.array(out_dim, jnp.float32))
    w1 = jax.random.uniform(k1, (in_dim, out_dim), dtype, -lim1, lim1)
    b1 = jax.random.uniform(k2, (1, out_dim), dtype, -lim1, lim1)
    w2 = jax.random.uniform(k3, (out_dim, out_dim), dtype, -lim2, lim2)
    b2 = jax.random.uniform(k4, (1, out_dim), dtype, -lim2, lim2)
    return w1, b1, w2, b2


if __name__ == "__main__":
    key = jax.random.PRNGKey(0)
    kx, kp = jax.random.split(key)

    # Small demo shape; batch of 64 gives a 4-step grid (exercises pipelining).
    batch, in_dim, out_dim = 64, 32, 32
    x = jax.random.normal(kx, (batch, in_dim), jnp.float32)
    w1, b1, w2, b2 = init_adjust_dim_params(kp, in_dim, out_dim)

    out = adjust_dim_forward(x, w1, b1, w2, b2)
    out = jax.block_until_ready(out)

    # Pure-JAX reference check (f32 path is exact).
    ref = jnp.tanh(jnp.tanh(x @ w1 + b1) @ w2 + b2)
    assert out.shape == (batch, out_dim)
    assert jnp.allclose(out, ref, atol=1e-5, rtol=1e-5)

    print("KERNEL_OK")
</pallas_src>

<mosaic_0001>
module attributes {stable_mosaic.version = 11 : i64} {
  func.func @_adjust_dim_fused_kernel(%arg0: i32, %arg1: memref<16x32xf32, #tpu.memory_space<vmem>>, %arg2: memref<32x32xf32, #tpu.memory_space<vmem>>, %arg3: memref<1x32xf32, #tpu.memory_space<vmem>>, %arg4: memref<32x32xf32, #tpu.memory_space<vmem>>, %arg5: memref<1x32xf32, #tpu.memory_space<vmem>>, %arg6: memref<16x32xf32, #tpu.memory_space<vmem>>) attributes {dimension_semantics = [#tpu.dimension_semantics<parallel>], iteration_bounds = array<i64: 4>, scalar_prefetch = 0 : i64, scratch_operands = 0 : i64, tpu.core_type = #tpu.core_type<tc>, window_params = [{transform_indices = @transform_0, window_bounds = array<i64: 16, 32>}, {pipeline_mode = #tpu.pipeline_mode<synchronous>, transform_indices = @transform_1, window_bounds = array<i64: 32, 32>}, {pipeline_mode = #tpu.pipeline_mode<synchronous>, transform_indices = @transform_2, window_bounds = array<i64: 1, 32>}, {pipeline_mode = #tpu.pipeline_mode<synchronous>, transform_indices = @transform_3, window_bounds = array<i64: 32, 32>}, {pipeline_mode = #tpu.pipeline_mode<synchronous>, transform_indices = @transform_4, window_bounds = array<i64: 1, 32>}, {transform_indices = @transform_5, window_bounds = array<i64: 16, 32>}]} {
    %c0 = arith.constant 0 : index
    %c0_0 = arith.constant 0 : index
    %0 = vector.load %arg1[%c0, %c0_0] : memref<16x32xf32, #tpu.memory_space<vmem>>, vector<16x32xf32>
    %c0_1 = arith.constant 0 : index
    %c0_2 = arith.constant 0 : index
    %1 = vector.load %arg2[%c0_1, %c0_2] : memref<32x32xf32, #tpu.memory_space<vmem>>, vector<32x32xf32>
    %cst = arith.constant dense<0.000000e+00> : vector<16x32xf32>
    %2 = tpu.matmul %0, %1, %cst {dimension_numbers = #tpu.dot_dimension_numbers<[1], [0], [0], [1], [0, 0, 1, 1], [], []>} : vector<16x32xf32>, vector<32x32xf32>, vector<16x32xf32> -> vector<16x32xf32>
    %c0_3 = arith.constant 0 : index
    %c0_4 = arith.constant 0 : index
    %3 = vector.load %arg3[%c0_3, %c0_4] : memref<1x32xf32, #tpu.memory_space<vmem>>, vector<1x32xf32>
    %4 = vector.broadcast %3 : vector<1x32xf32> to vector<16x32xf32>
    %5 = arith.addf %2, %4 : vector<16x32xf32>
    %6 = math.tanh %5 : vector<16x32xf32>
    %c0_5 = arith.constant 0 : index
    %c0_6 = arith.constant 0 : index
    %7 = vector.load %arg4[%c0_5, %c0_6] : memref<32x32xf32, #tpu.memory_space<vmem>>, vector<32x32xf32>
    %cst_7 = arith.constant dense<0.000000e+00> : vector<16x32xf32>
    %8 = tpu.matmul %6, %7, %cst_7 {dimension_numbers = #tpu.dot_dimension_numbers<[1], [0], [0], [1], [0, 0, 1, 1], [], []>} : vector<16x32xf32>, vector<32x32xf32>, vector<16x32xf32> -> vector<16x32xf32>
    %c0_8 = arith.constant 0 : index
    %c0_9 = arith.constant 0 : index
    %9 = vector.load %arg5[%c0_8, %c0_9] : memref<1x32xf32, #tpu.memory_space<vmem>>, vector<1x32xf32>
    %10 = vector.broadcast %9 : vector<1x32xf32> to vector<16x32xf32>
    %11 = arith.addf %8, %10 : vector<16x32xf32>
    %12 = math.tanh %11 : vector<16x32xf32>
    %c0_10 = arith.constant 0 : index
    %c0_11 = arith.constant 0 : index
    %13 = vector.load %arg6[%c0_10, %c0_11] : memref<16x32xf32, #tpu.memory_space<vmem>>, vector<16x32xf32>
    tpu.vector_store %arg6[%c0_10, %c0_11], %12 {strides = array<i32>} : memref<16x32xf32, #tpu.memory_space<vmem>>, vector<16x32xf32>,
    return
  }
  func.func @transform_0(%arg0: i32) -> (i32, i32) {
    %c0_i32 = arith.constant 0 : i32
    %c0_i32_0 = arith.constant 0 : i32
    return %arg0, %c0_i32 : i32, i32
  }
  func.func @transform_1(%arg0: i32) -> (i32, i32) {
    %c0_i32 = arith.constant 0 : i32
    %c0_i32_0 = arith.constant 0 : i32
    %c0_i32_1 = arith.constant 0 : i32
    return %c0_i32, %c0_i32_0 : i32, i32
  }
  func.func @transform_2(%arg0: i32) -> (i32, i32) {
    %c0_i32 = arith.constant 0 : i32
    %c0_i32_0 = arith.constant 0 : i32
    %c0_i32_1 = arith.constant 0 : i32
    return %c0_i32, %c0_i32_0 : i32, i32
  }
  func.func @transform_3(%arg0: i32) -> (i32, i32) {
    %c0_i32 = arith.constant 0 : i32
    %c0_i32_0 = arith.constant 0 : i32
    %c0_i32_1 = arith.constant 0 : i32
    return %c0_i32, %c0_i32_0 : i32, i32
  }
  func.func @transform_4(%arg0: i32) -> (i32, i32) {
    %c0_i32 = arith.constant 0 : i32
    %c0_i32_0 = arith.constant 0 : i32
    %c0_i32_1 = arith.constant 0 : i32
    return %c0_i32, %c0_i32_0 : i32, i32
  }
  func.func @transform_5(%arg0: i32) -> (i32, i32) {
    %c0_i32 = arith.constant 0 : i32
    %c0_i32_0 = arith.constant 0 : i32
    return %arg0, %c0_i32 : i32, i32
  }
}

</mosaic_0001>

<llo_original>
// kernel: adjust_dim_forward.1
$region0: #{adjust_dim_forward.1}
  #allocation0 [shape = 'u32[]', space=smem, size = 0x4, offset = 0x4, fixed_abs, tag = 'smem constant byte address 0x4 - core index']
  #allocation1 [shape = 'u32[144,128]{1,0:T(1,128)}', space=vmem, size = 0x12000, scoped, tag = 'internal scratch']
  %s0 = inlined_call_operand.vmem [shape: f32[64,32], index: 0, kind: input, shape index: {}]
  %s1 = inlined_call_operand.vmem [shape: f32[32,32], index: 1, kind: input, shape index: {}]
  %s2 = inlined_call_operand.vmem [shape: f32[1,32], index: 2, kind: input, shape index: {}]
  %s3 = inlined_call_operand.vmem [shape: f32[32,32], index: 3, kind: input, shape index: {}]
  %s4 = inlined_call_operand.vmem [shape: f32[1,32], index: 4, kind: input, shape index: {}]
  %s5 = inlined_call_operand.vmem [shape: f32[64,32], index: 5, kind: output, shape index: {}]
  %s6 = sld [smem:[#allocation0]]
  $region53: #{adjust_dim_forward.1} parent=0
    _
  %s8 = ssub.s32 1, %s6
  %s9 = scalar_select 0, %s8, %s6
  loop: start=0, step=1, limit=6
  $region2: #{adjust_dim_forward.1} parent=0 // loop_pre_header
    _
  $region3: #{adjust_dim_forward.1} parent=0 // loop_header
    %s11 = sphi 0, %s15
    %p12 = scmp.ge.s32.totalorder %s11, 6
    %s21 = sphi 0, %s23
    %s24 = sphi 0, %s21
    %s25 = sphi 0, %s24
    %s41 = sphi 0, %s25
    %s45 = sphi 0, %s45
    %s47 = sphi 0, %s45
    %s48 = sphi 0, %s47
    %s62 = sphi 0, %s48
    %s66 = sphi 0, %s66
    %s68 = sphi 0, %s66
    %s69 = sphi 0, %s68
    %s83 = sphi 0, %s69
    %s87 = sphi 0, %s87
    %s89 = sphi 0, %s87
    %s90 = sphi 0, %s89
    %s104 = sphi 0, %s90
    %s108 = sphi 0, %s108
    %s110 = sphi 0, %s108
    %s111 = sphi 0, %s110
    %s125 = sphi 0, %s111
    %s131 = sphi 0, %s133
    %s134 = sphi 0, %s131
    %s135 = sphi 0, %s134
    %s151 = sphi 0, %s135
  $region4: #{adjust_dim_forward.1} parent=0 // loop_header_branch
    %14 = sbr.rel (%p12) target = $region8
  $region5: #{adjust_dim_forward.1} parent=0 // loop_body
    %s16 = ssub.s32 %s11, 1
    %s17 = ssub.s32 %s11, 2
    %s18 = sadd.s32 %s11, 1
    %s19 = ssub.s32 %s11, %s18
    %p20 = scmp.eq.s32.totalorder %s19, 0
    %s22 = sadd.s32 %s21, 1
    %s23 = scalar_select %p20, %s21, %s22
    %p26 = pneg %p20
    %p27 = scmp.eq.s32.totalorder %s11, 3
    %p28 = por %p26, %p27
    %p29 = scmp.ne.s32.totalorder %s21, %s24
    %p30 = scmp.eq.s32.totalorder %s11, 0
    %p31 = por %p29, %p30
    %p32 = scmp.ne.s32.totalorder %s21, %s24
    %p33 = scmp.eq.s32.totalorder %s16, 3
    %p34 = por %p32, %p33
    %p35 = scmp.ne.s32.totalorder %s24, %s25
    %p36 = scmp.eq.s32.totalorder %s16, 0
    %p37 = por %p35, %p36
    %p38 = scmp.ne.s32.totalorder %s24, %s25
    %p39 = scmp.eq.s32.totalorder %s17, 3
    %p40 = por %p38, %p39
    %p42 = scmp.ne.s32.totalorder %s25, %s41
    %p43 = scmp.eq.s32.totalorder %s17, 0
    %p44 = por %p42, %p43
    %s46 = sadd.s32 %s45, 1
    %p49 = scmp.eq.s32.totalorder %s11, 3
    %p50 = scmp.ne.s32.totalorder %s45, %s47
    %p51 = scmp.eq.s32.totalorder %s11, 0
    %p52 = por %p50, %p51
    %p53 = scmp.ne.s32.totalorder %s45, %s47
    %p54 = scmp.eq.s32.totalorder %s16, 3
    %p55 = por %p53, %p54
    %p56 = scmp.ne.s32.totalorder %s47, %s48
    %p57 = scmp.eq.s32.totalorder %s16, 0
    %p58 = por %p56, %p57
    %p59 = scmp.ne.s32.totalorder %s47, %s48
    %p60 = scmp.eq.s32.totalorder %s17, 3
    %p61 = por %p59, %p60
    %p63 = scmp.ne.s32.totalorder %s48, %s62
    %p64 = scmp.eq.s32.totalorder %s17, 0
    %p65 = por %p63, %p64
    %s67 = sadd.s32 %s66, 1
    %p70 = scmp.eq.s32.totalorder %s11, 3
    %p71 = scmp.ne.s32.totalorder %s66, %s68
    %p72 = scmp.eq.s32.totalorder %s11, 0
    %p73 = por %p71, %p72
    %p74 = scmp.ne.s32.totalorder %s66, %s68
    %p75 = scmp.eq.s32.totalorder %s16, 3
    %p76 = por %p74, %p75
    %p77 = scmp.ne.s32.totalorder %s68, %s69
    %p78 = scmp.eq.s32.totalorder %s16, 0
    %p79 = por %p77, %p78
    %p80 = scmp.ne.s32.totalorder %s68, %s69
    %p81 = scmp.eq.s32.totalorder %s17, 3
    %p82 = por %p80, %p81
    %p84 = scmp.ne.s32.totalorder %s69, %s83
    %p85 = scmp.eq.s32.totalorder %s17, 0
    %p86 = por %p84, %p85
    %s88 = sadd.s32 %s87, 1
    %p91 = scmp.eq.s32.totalorder %s11, 3
    %p92 = scmp.ne.s32.totalorder %s87, %s89
    %p93 = scmp.eq.s32.totalorder %s11, 0
    %p94 = por %p92, %p93
    %p95 = scmp.ne.s32.totalorder %s87, %s89
    %p96 = scmp.eq.s32.totalorder %s16, 3
    %p97 = por %p95, %p96
    %p98 = scmp.ne.s32.totalorder %s89, %s90
    %p99 = scmp.eq.s32.totalorder %s16, 0
    %p100 = por %p98, %p99
    %p101 = scmp.ne.s32.totalorder %s89, %s90
    %p102 = scmp.eq.s32.totalorder %s17, 3
    %p103 = por %p101, %p102
    %p105 = scmp.ne.s32.totalorder %s90, %s104
    %p106 = scmp.eq.s32.totalorder %s17, 0
    %p107 = por %p105, %p106
    %s109 = sadd.s32 %s108, 1
    %p112 = scmp.eq.s32.totalorder %s11, 3
    %p113 = scmp.ne.s32.totalorder %s108, %s110
    %p114 = scmp.eq.s32.totalorder %s11, 0
    %p115 = por %p113, %p114
    %p116 = scmp.ne.s32.totalorder %s108, %s110
    %p117 = scmp.eq.s32.totalorder %s16, 3
    %p118 = por %p116, %p117
    %p119 = scmp.ne.s32.totalorder %s110, %s111
    %p120 = scmp.eq.s32.totalorder %s16, 0
    %p121 = por %p119, %p120
    %p122 = scmp.ne.s32.totalorder %s110, %s111
    %p123 = scmp.eq.s32.totalorder %s17, 3
    %p124 = por %p122, %p123
    %p126 = scmp.ne.s32.totalorder %s111, %s125
    %p127 = scmp.eq.s32.totalorder %s17, 0
    %p128 = por %p126, %p127
    %s129 = ssub.s32 %s11, %s18
    %p130 = scmp.eq.s32.totalorder %s129, 0
    %s132 = sadd.s32 %s131, 1
    %s133 = scalar_select %p130, %s131, %s132
    %p136 = pneg %p130
    %p137 = scmp.eq.s32.totalorder %s11, 3
    %p138 = por %p136, %p137
    %p139 = scmp.ne.s32.totalorder %s131, %s134
    %p140 = scmp.eq.s32.totalorder %s11, 0
    %p141 = por %p139, %p140
    %p142 = scmp.ne.s32.totalorder %s131, %s134
    %p143 = scmp.eq.s32.totalorder %s16, 3
    %p144 = por %p142, %p143
    %p145 = scmp.ne.s32.totalorder %s134, %s135
    %p146 = scmp.eq.s32.totalorder %s16, 0
    %p147 = por %p145, %p146
    %p148 = scmp.ne.s32.totalorder %s134, %s135
    %p149 = scmp.eq.s32.totalorder %s17, 3
    %p150 = por %p148, %p149
    %p152 = scmp.ne.s32.totalorder %s135, %s151
    %p153 = scmp.eq.s32.totalorder %s17, 0
    %p154 = por %p152, %p153
    %p155 = scmp.le.s32.totalorder 1, %s11
    %p156 = scmp.lt.s32.totalorder %s11, 5
    %p157 = pnand %p155, %p156
    %p158 = pneg %p157
    // Predicated region
    $region9: #{adjust_dim_forward.1} parent=5 // pred_check
      _
    $region10: #{adjust_dim_forward.1} parent=5 // pred_check_branch
      %160 = sbr.rel (%p157) target = $region12
    $region11: #{adjust_dim_forward.1} parent=5 // pred_region
      %s161 = ssub.s32 %s11, 1
      // Predicated region
      $region13: #{adjust_dim_forward.1} parent=11 // pred_check
        %p162 = pneg %p58
      $region14: #{adjust_dim_forward.1} parent=11 // pred_check_branch
        %164 = sbr.rel (%p162) target = $region16
      $region15: #{adjust_dim_forward.1} parent=11 // pred_region
        _
      $region16: #{adjust_dim_forward.1} parent=11 // pred_fallthru
        _
      // Predicated region
      $region17: #{adjust_dim_forward.1} parent=11 // pred_check
        %p165 = pneg %p79
      $region18: #{adjust_dim_forward.1} parent=11 // pred_check_branch
        %167 = sbr.rel (%p165) target = $region20
      $region19: #{adjust_dim_forward.1} parent=11 // pred_region
        _
      $region20: #{adjust_dim_forward.1} parent=11 // pred_fallthru
        _
      // Predicated region
      $region21: #{adjust_dim_forward.1} parent=11 // pred_check
        %p168 = pneg %p100
      $region22: #{adjust_dim_forward.1} parent=11 // pred_check_branch
        %170 = sbr.rel (%p168) target = $region24
      $region23: #{adjust_dim_forward.1} parent=11 // pred_region
        _
      $region24: #{adjust_dim_forward.1} parent=11 // pred_fallthru
        _
      // Predicated region
      $region25: #{adjust_dim_forward.1} parent=11 // pred_check
        %p171 = pneg %p121
      $region26: #{adjust_dim_forward.1} parent=11 // pred_check_branch
        %173 = sbr.rel (%p171) target = $region28
      $region27: #{adjust_dim_forward.1} parent=11 // pred_region
        _
      $region28: #{adjust_dim_forward.1} parent=11 // pred_fallthru
        _
    $region12: #{adjust_dim_forward.1} parent=5 // pred_fallthru
      _
    %p174 = scmp.lt.s32.totalorder %s11, 4
    // Predicated region
    $region29: #{adjust_dim_forward.1} parent=5 // pred_check
      %p175 = pneg %p174
    $region30: #{adjust_dim_forward.1} parent=5 // pred_check_branch
      %177 = sbr.rel (%p175) target = $region32
    $region31: #{adjust_dim_forward.1} parent=5 // pred_region
      // Predicated region
      $region33: #{adjust_dim_forward.1} parent=31 // pred_check
        %p178 = pneg %p31
      $region34: #{adjust_dim_forward.1} parent=31 // pred_check_branch
        %180 = sbr.rel (%p178) target = $region36
      $region35: #{adjust_dim_forward.1} parent=31 // pred_region
        %s181 = smul.u32 2, %s11
        %p182 = scmp.lt.s32.totalorder %s181, 7
        %s183 = scalar_select %p182, %s181, 7
        %s184 = smul.addr %s183, 8
        %s185 = scalar_lea.vmem %s0, %s184
        %s186 = smul.u32 2, %s11
      $region36: #{adjust_dim_forward.1} parent=31 // pred_fallthru
        _
    $region32: #{adjust_dim_forward.1} parent=5 // pred_fallthru
      _
    %p187 = scmp.le.s32.totalorder 1, %s11
    %p188 = scmp.lt.s32.totalorder %s11, 5
    %p189 = pnand %p187, %p188
    %p190 = pneg %p189
    // Predicated region
    $region37: #{adjust_dim_forward.1} parent=5 // pred_check
      _
    $region38: #{adjust_dim_forward.1} parent=5 // pred_check_branch
      %192 = sbr.rel (%p189) target = $region40
    $region39: #{adjust_dim_forward.1} parent=5 // pred_region
      %s193 = ssub.s32 %s11, 1
      %s194 = smul.u32 2, %s16
      %p195 = scmp.lt.s32.totalorder %s194, 7
      %s196 = scalar_select %p195, %s194, 7
      %s197 = smul.addr %s196, 8
      %s198 = scalar_lea.vmem %s0, %s197
      %p199 = pneg %p37
      %p200 = pneg %p34
      %p201 = pneg %p58
      %p202 = pneg %p55
      %p203 = pneg %p79
      %p204 = pneg %p76
      %p205 = pneg %p100
      %p206 = pneg %p97
      %p207 = pneg %p121
      %p208 = pneg %p118
      %p209 = pneg %p147
      %p210 = pneg %p144
      %s211 = smul.u32 2, %s16
      %p212 = scmp.lt.s32.totalorder %s211, 7
      %s213 = scalar_select %p212, %s211, 7
      %s214 = smul.addr %s213, 8
      %s215 = scalar_lea.vmem %s5, %s214
      %s216 = smul.u32 2, %s16
      %p217 = scmp.lt.s32.totalorder %s216, 7
      %s218 = scalar_select %p217, %s216, 7
      %s219 = smul.addr %s218, 8
      %s220 = scalar_lea.vmem %s0, %s219
      %s221 = smul.u32 2, %s16
      %s222 = smul.u32 2, %s16
      %p223 = scmp.lt.s32.totalorder %s222, 7
      %s224 = scalar_select %p223, %s222, 7
      %s225 = smul.addr %s224, 8
      %s226 = scalar_lea.vmem %s5, %s225
      %s227 = smul.u32 2, %s16
      %v228 = vld [vmem:[%s220] sm:$0xff]
      %v229 = vld [vmem:[%s220 + $0x8] sm:$0xff]
      %v230 = vld [vmem:[%s1] sm:$0xff]
      %v231 = vld [vmem:[%s1 + $0x8] sm:$0xff]
      %v232 = vld [vmem:[%s1 + $0x10] sm:$0xff]
      %v233 = vld [vmem:[%s1 + $0x18] sm:$0xff]
      %v234 = vld [vmem:[%s2] sm:$0x1]
      %v236 = vlaneseq
      %v237 = vshrl.u32 %v236, 7
      %v238 = vsub.s32 0, %v237
      %v239 = vrot.slane %v234, %v238
      %vm241 = vcmask 261120
      %v243 = vsel %vm241, %v228, 0
      %v246 = vsel %vm241, %v229, 0
      %248 = vmatprep.subr.mxu0 0.0
      %249 = vmatpush1.msra.mxu0 %v230
      %250 = vmatprep.subr.mxu0 0.0
      %251 = vmatpush1.msra.mxu0 %v231
      %252 = vmatprep.subr.mxu0 0.0
      %253 = vmatpush1.msra.mxu0 %v232
      %254 = vmatprep.subr.mxu0 0.0
      %255 = vmatpush1.msra.mxu0 %v233
      %256 = vmatprep.subr.mxu0 0.0
      %257 = vmatpush1.msra.mxu0 0.0
      %258 = vmatprep.subr.mxu0 0.0
      %259 = vmatpush1.msra.mxu0 0.0
      %260 = vmatprep.subr.mxu0 0.0
      %261 = vmatpush1.msra.mxu0 0.0
      %262 = vmatprep.subr.mxu0 0.0
      %263 = vmatpush1.msra.mxu0 0.0
      %264 = vmatprep.subr.mxu0 0.0
      %265 = vmatpush1.msra.mxu0 0.0
      %266 = vmatprep.subr.mxu0 0.0
      %267 = vmatpush1.msra.mxu0 0.0
      %268 = vmatprep.subr.mxu0 0.0
      %269 = vmatpush1.msra.mxu0 0.0
      %270 = vmatprep.subr.mxu0 0.0
      %271 = vmatpush1.msra.mxu0 0.0
      %272 = vmatprep.subr.mxu0 0.0
      %273 = vmatpush1.msra.mxu0 0.0
      %274 = vmatprep.subr.mxu0 0.0
      %275 = vmatpush1.msra.mxu0 0.0
      %276 = vmatprep.subr.mxu0 0.0
      %277 = vmatpush1.msra.mxu0 0.0
      %278 = vmatprep.subr.mxu0 0.0
      %279 = vmatpush1.msra.mxu0 0.0
      %280 = vmatprep.subr.mxu0 0.0
      %281 = vmatpush1.msra.mxu0 0.0
      %282 = vmatprep.subr.mxu0 0.0
      %283 = vmatpush1.msra.mxu0 0.0
      %284 = vmatprep.subr.mxu0 0.0
      %285 = vmatpush1.msra.mxu0 0.0
      %286 = vmatprep.subr.mxu0 0.0
      %287 = vmatpush1.msra.mxu0 0.0
      %288 = vmatprep.subr.mxu0 0.0
      %289 = vmatpush1.msra.mxu0 0.0
      %290 = vmatprep.subr.mxu0 0.0
      %291 = vmatpush1.msra.mxu0 0.0
      %292 = vmatprep.subr.mxu0 0.0
      %293 = vmatpush1.msra.mxu0 0.0
      %294 = vmatprep.subr.mxu0 0.0
      %295 = vmatpush1.msra.mxu0 0.0
      %296 = vmatprep.subr.mxu0 0.0
      %297 = vmatpush1.msra.mxu0 0.0
      %298 = vmatprep.subr.mxu0 0.0
      %299 = vmatpush1.msra.mxu0 0.0
      %300 = vmatprep.subr.mxu0 0.0
      %301 = vmatpush1.msra.mxu0 0.0
      %302 = vmatprep.subr.mxu0 0.0
      %303 = vmatpush1.msra.mxu0 0.0
      %304 = vmatprep.subr.mxu0 0.0
      %305 = vmatpush1.msra.mxu0 0.0
      %306 = vmatprep.subr.mxu0 0.0
      %307 = vmatpush1.msra.mxu0 0.0
      %308 = vmatprep.subr.mxu0 0.0
      %309 = vmatpush1.msra.mxu0 0.0
      %310 = vmatprep.subr.mxu0 0.0
      %311 = vmatpush1.msra.mxu0 0.0
      %312 = vmatprep.mubr.f32.mxu0 0.0
      %313 = vmatmul.mubr.f32.gmra.mrb[0].mxu0 %v243
      %v314 = vpop.f32.mrb[0].mxu0
      %v315 = vadd.f32 %v239, %v314
      %v316 = vpop.f32.mrb[0].mxu0
      %317 = vmatprep.mubr.f32.mxu0 0.0
      %318 = vmatmul.mubr.f32.gmra.mrb[0].mxu0 %v246
      %v319 = vpop.f32.mrb[0].mxu0
      %v320 = vadd.f32 %v239, %v319
      %v321 = vpop.f32.mrb[0].mxu0
      %322 = vdwg.mxu0
      %v323 = vtanh.pop %v315
      %v324 = vtanh.pop %v320
      %v325 = vld [vmem:[%s3] sm:$0xff]
      %v326 = vld [vmem:[%s3 + $0x8] sm:$0xff]
      %v327 = vld [vmem:[%s3 + $0x10] sm:$0xff]
      %v328 = vld [vmem:[%s3 + $0x18] sm:$0xff]
      %v329 = vld [vmem:[%s4] sm:$0x1]
      %v331 = vlaneseq
      %v332 = vshrl.u32 %v331, 7
      %v333 = vsub.s32 0, %v332
      %v334 = vrot.slane %v329, %v333
      %v337 = vsel %vm241, %v323, 0
      %v340 = vsel %vm241, %v324, 0
      %342 = vmatprep.subr.mxu0 0.0
      %343 = vmatpush1.msra.mxu0 %v325
      %344 = vmatprep.subr.mxu0 0.0
      %345 = vmatpush1.msra.mxu0 %v326
      %346 = vmatprep.subr.mxu0 0.0
      %347 = vmatpush1.msra.mxu0 %v327
      %348 = vmatprep.subr.mxu0 0.0
      %349 = vmatpush1.msra.mxu0 %v328
      %350 = vmatprep.subr.mxu0 0.0
      %351 = vmatpush1.msra.mxu0 0.0
      %352 = vmatprep.subr.mxu0 0.0
      %353 = vmatpush1.msra.mxu0 0.0
      %354 = vmatprep.subr.mxu0 0.0
      %355 = vmatpush1.msra.mxu0 0.0
      %356 = vmatprep.subr.mxu0 0.0
      %357 = vmatpush1.msra.mxu0 0.0
      %358 = vmatprep.subr.mxu0 0.0
      %359 = vmatpush1.msra.mxu0 0.0
      %360 = vmatprep.subr.mxu0 0.0
      %361 = vmatpush1.msra.mxu0 0.0
      %362 = vmatprep.subr.mxu0 0.0
      %363 = vmatpush1.msra.mxu0 0.0
      %364 = vmatprep.subr.mxu0 0.0
      %365 = vmatpush1.msra.mxu0 0.0
      %366 = vmatprep.subr.mxu0 0.0
      %367 = vmatpush1.msra.mxu0 0.0
      %368 = vmatprep.subr.mxu0 0.0
      %369 = vmatpush1.msra.mxu0 0.0
      %370 = vmatprep.subr.mxu0 0.0
      %371 = vmatpush1.msra.mxu0 0.0
      %372 = vmatprep.subr.mxu0 0.0
      %373 = vmatpush1.msra.mxu0 0.0
      %374 = vmatprep.subr.mxu0 0.0
      %375 = vmatpush1.msra.mxu0 0.0
      %376 = vmatprep.subr.mxu0 0.0
      %377 = vmatpush1.msra.mxu0 0.0
      %378 = vmatprep.subr.mxu0 0.0
      %379 = vmatpush1.msra.mxu0 0.0
      %380 = vmatprep.subr.mxu0 0.0
      %381 = vmatpush1.msra.mxu0 0.0
      %382 = vmatprep.subr.mxu0 0.0
      %383 = vmatpush1.msra.mxu0 0.0
      %384 = vmatprep.subr.mxu0 0.0
      %385 = vmatpush1.msra.mxu0 0.0
      %386 = vmatprep.subr.mxu0 0.0
      %387 = vmatpush1.msra.mxu0 0.0
      %388 = vmatprep.subr.mxu0 0.0
      %389 = vmatpush1.msra.mxu0 0.0
      %390 = vmatprep.subr.mxu0 0.0
      %391 = vmatpush1.msra.mxu0 0.0
      %392 = vmatprep.subr.mxu0 0.0
      %393 = vmatpush1.msra.mxu0 0.0
      %394 = vmatprep.subr.mxu0 0.0
      %395 = vmatpush1.msra.mxu0 0.0
      %396 = vmatprep.subr.mxu0 0.0
      %397 = vmatpush1.msra.mxu0 0.0
      %398 = vmatprep.subr.mxu0 0.0
      %399 = vmatpush1.msra.mxu0 0.0
      %400 = vmatprep.subr.mxu0 0.0
      %401 = vmatpush1.msra.mxu0 0.0
      %402 = vmatprep.subr.mxu0 0.0
      %403 = vmatpush1.msra.mxu0 0.0
      %404 = vmatprep.subr.mxu0 0.0
      %405 = vmatpush1.msra.mxu0 0.0
      %406 = vmatprep.mubr.f32.mxu0 0.0
      %407 = vmatmul.mubr.f32.gmra.mrb[0].mxu0 %v337
      %v408 = vpop.f32.mrb[0].mxu0
      %v409 = vadd.f32 %v334, %v408
      %v410 = vpop.f32.mrb[0].mxu0
      %411 = vmatprep.mubr.f32.mxu0 0.0
      %412 = vmatmul.mubr.f32.gmra.mrb[0].mxu0 %v340
      %v413 = vpop.f32.mrb[0].mxu0
      %v414 = vadd.f32 %v334, %v413
      %v415 = vpop.f32.mrb[0].mxu0
      %416 = vdwg.mxu0
      %v417 = vtanh.pop %v409
      %v418 = vtanh.pop %v414
      %419 = vst.msk [vmem:[%s226] sm:$0xff] %vm241, %v417
      %420 = vst.msk [vmem:[%s226 + $0x8] sm:$0xff] %vm241, %v418
      %s421 = smul.u32 2, %s16
      %p422 = scmp.lt.s32.totalorder %s421, 7
      %s423 = scalar_select %p422, %s421, 7
      %s424 = smul.addr %s423, 8
      %s425 = scalar_lea.vmem %s5, %s424
      // Predicated region
      $region41: #{adjust_dim_forward.1} parent=39 // pred_check
        %p426 = pneg %p144
      $region42: #{adjust_dim_forward.1} parent=39 // pred_check_branch
        %428 = sbr.rel (%p426) target = $region44
      $region43: #{adjust_dim_forward.1} parent=39 // pred_region
        %s429 = smul.u32 2, %s16
      $region44: #{adjust_dim_forward.1} parent=39 // pred_fallthru
        _
    $region40: #{adjust_dim_forward.1} parent=5 // pred_fallthru
      _
    %p430 = scmp.le.s32.totalorder 2, %s11
    // Predicated region
    $region45: #{adjust_dim_forward.1} parent=5 // pred_check
      %p431 = pneg %p430
    $region46: #{adjust_dim_forward.1} parent=5 // pred_check_branch
      %433 = sbr.rel (%p431) target = $region48
    $region47: #{adjust_dim_forward.1} parent=5 // pred_region
      %s434 = ssub.s32 %s11, 2
      // Predicated region
      $region49: #{adjust_dim_forward.1} parent=47 // pred_check
        %p435 = pneg %p150
      $region50: #{adjust_dim_forward.1} parent=47 // pred_check_branch
        %437 = sbr.rel (%p435) target = $region52
      $region51: #{adjust_dim_forward.1} parent=47 // pred_region
        %s438 = smul.u32 2, %s17
        %p439 = scmp.lt.s32.totalorder %s438, 7
        %s440 = scalar_select %p439, %s438, 7
        %s441 = smul.addr %s440, 8
        %s442 = scalar_lea.vmem %s5, %s441
      $region52: #{adjust_dim_forward.1} parent=47 // pred_fallthru
        _
    $region48: #{adjust_dim_forward.1} parent=5 // pred_fallthru
      _
  $region6: #{adjust_dim_forward.1} parent=0 // loop_footer
    %s15 = sadd.s32 1, %s11
  $region7: #{adjust_dim_forward.1} parent=0 // loop_footer_branch
    %10 = sbr.rel target = $region3
  $region8: #{adjust_dim_forward.1} parent=0 // loop_exit
    _

</llo_original>
